<compile_context>
chip_gen: v7x
topology: tpu7x:2x2x1
jax: 0.10.0
libtpu: 0.0.40
codegen_flags: <defaults>
</compile_context>

<pallas_src>
import functools

import jax
import jax.numpy as jnp
from jax.experimental import pallas as pl
from jax.experimental.pallas import tpu as pltpu


def build_pe_table(max_length: int, nb_in: int) -> jnp.ndarray:
    """Replicates the PyTorch __init__ buffer: shape (max_length, 1, nb_in)."""
    position = jnp.arange(max_length, dtype=jnp.float32)[:, None]           # (L, 1)
    div_term = jnp.exp(
        jnp.arange(0, nb_in, 2, dtype=jnp.float32) * (-jnp.log(10000.0) / nb_in)
    )                                                                        # (D/2,)
    angles = position * div_term                                             # (L, D/2)
    pe = jnp.zeros((max_length, nb_in), dtype=jnp.float32)
    pe = pe.at[:, 0::2].set(jnp.sin(angles))
    pe = pe.at[:, 1::2].set(jnp.cos(angles))
    return pe[:, None, :]                                                    # (L, 1, D)


def _fold_pe(pe_rows, batch):
    # pe_rows: (tile_s, D) -> (tile_s, B*D), matching x.reshape(S, B*D) ordering
    # where element (s, b, d) lives at column b*D + d.
    if batch == 1:
        return pe_rows
    return jnp.concatenate([pe_rows] * batch, axis=-1)


def _pe_add_kernel(x_ref, pe_ref, o_ref, *, batch, tile_s):
    i = pl.program_id(0)
    start = pl.multiple_of(i * tile_s, tile_s)
    pe_rows = pe_ref[pl.ds(start, tile_s), :]                # (tile_s, D), PE resident
    o_ref[...] = (x_ref[...] + _fold_pe(pe_rows, batch)).astype(o_ref.dtype)


def _pe_add_dropout_kernel(x_ref, pe_ref, bits_ref, o_ref, *,
                           batch, tile_s, threshold, scale):
    i = pl.program_id(0)
    start = pl.multiple_of(i * tile_s, tile_s)
    pe_rows = pe_ref[pl.ds(start, tile_s), :]
    y = x_ref[...] + _fold_pe(pe_rows, batch)
    # Inverted dropout: keep prob = 1 - p.  P(bits >= threshold) = 1 - p for
    # uniform uint32 bits; the 1/(1-p) scale is folded into the select so the
    # kept branch is a single multiply and no zeros_like(y) is materialized.
    keep = bits_ref[...] >= jnp.uint32(threshold)
    y = y * jnp.where(keep, jnp.float32(scale), jnp.float32(0.0))
    o_ref[...] = y.astype(o_ref.dtype)


def _pick_tile_s(seq_len, row_bytes, target_bytes=2 << 20):
    """Largest row-tile with <= ~2 MiB per buffered block (sublane-aligned)."""
    t = max(1, target_bytes // max(row_bytes, 1))
    if t >= seq_len:
        return seq_len                      # full extent: always a legal block dim
    return min(seq_len, max(8, (t // 8) * 8))


def positional_encoding_forward(x, pe_table, *, p=0.1, training=False, seed=0,
                                tile_s=None):
    """x: (S, B, D); pe_table: (max_length, 1, D). Returns (S, B, D)."""
    S, B, D = x.shape
    BD = B * D
    x2 = x.reshape(S, BD)                   # free metadata reshape; D stays minor
    pe2 = pe_table[:S, 0, :]                # (S, D), like self.pe[:x.size(0)]

    if tile_s is None:
        tile_s = _pick_tile_s(S, BD * x2.dtype.itemsize)
    grid_s = pl.cdiv(S, tile_s)
    s_pad = grid_s * tile_s
    if s_pad != S:                          # pad PE so in-kernel pl.ds never OOBs
        pe2 = jnp.pad(pe2, ((0, s_pad - S), (0, 0)))

    row_spec = pl.BlockSpec((tile_s, BD), lambda i: (i, 0))          # x / bits / out
    pe_spec = pl.BlockSpec((s_pad, D), lambda i: (0, 0))             # resident PE

    compiler_params = pltpu.CompilerParams(
        dimension_semantics=("parallel",),   # independent row tiles (megacore on v7x)
        vmem_limit_bytes=32 * 1024 * 1024,   # fits the 64 MiB v7x budget with margin
    )
    out_shape = jax.ShapeDtypeStruct((S, BD), x.dtype)

    if training and p > 0.0:
        threshold = min(int(round(float(p) * 4294967296.0)), 4294967295)
        scale = 1.0 / (1.0 - float(p))
        bits = jax.random.bits(jax.random.PRNGKey(seed), (S, BD), dtype=jnp.uint32)
        kernel = functools.partial(_pe_add_dropout_kernel, batch=B, tile_s=tile_s,
                                   threshold=threshold, scale=scale)
        out2 = pl.pallas_call(
            kernel,
            out_shape=out_shape,
            grid=(grid_s,),
            in_specs=[row_spec, pe_spec, row_spec],
            out_specs=row_spec,
            compiler_params=compiler_params,
        )(x2, pe2, bits)
    else:
        kernel = functools.partial(_pe_add_kernel, batch=B, tile_s=tile_s)
        out2 = pl.pallas_call(
            kernel,
            out_shape=out_shape,
            grid=(grid_s,),
            in_specs=[row_spec, pe_spec],
            out_specs=row_spec,
            compiler_params=compiler_params,
        )(x2, pe2)

    return out2.reshape(S, B, D)


if __name__ == "__main__":
    # Small shapes consistent with the module: x is (seq, batch, nb_in).
    seq, batch, nb_in = 8, 2, 32
    max_length = 64

    key = jax.random.PRNGKey(0)
    x = jax.random.normal(key, (seq, batch, nb_in), dtype=jnp.float32)
    pe_table = build_pe_table(max_length, nb_in)

    # Eval mode (dropout is identity): deterministic, checked against pure JAX.
    out_eval = jax.block_until_ready(
        positional_encoding_forward(x, pe_table, p=0.1, training=False))
    ref = x + pe_table[:seq]
    assert out_eval.shape == (seq, batch, nb_in)
    assert jnp.allclose(out_eval, ref, atol=1e-6, rtol=1e-6)

    # Multi-tile + ragged-S path: S=20 with tile_s=8 -> grid of 3, last tile partial.
    seq2 = 20
    x_big = jax.random.normal(jax.random.PRNGKey(1), (seq2, batch, nb_in),
                              dtype=jnp.float32)
    out_eval2 = jax.block_until_ready(
        positional_encoding_forward(x_big, pe_table, p=0.1, training=False, tile_s=8))
    ref2 = x_big + pe_table[:seq2]
    assert jnp.allclose(out_eval2, ref2, atol=1e-6, rtol=1e-6)

    # Training mode: every element must be 0 (dropped) or (x+pe)/(1-p) (kept).
    p = 0.1
    out_train = jax.block_until_ready(
        positional_encoding_forward(x, pe_table, p=p, training=True, seed=0))
    assert out_train.shape == (seq, batch, nb_in)
    scaled = ref / (1.0 - p)
    is_zero = jnp.abs(out_train) <= 1e-6
    is_kept = jnp.abs(out_train - scaled) <= 1e-5 + 1e-5 * jnp.abs(scaled)
    assert bool(jnp.all(is_zero | is_kept))

    print("KERNEL_OK")
</pallas_src>

<mosaic_0001>
module attributes {stable_mosaic.version = 11 : i64} {
  func.func @_pe_add_kernel(%arg0: i32, %arg1: memref<8x64xf32, #tpu.memory_space<vmem>>, %arg2: memref<8x32xf32, #tpu.memory_space<vmem>>, %arg3: memref<8x64xf32, #tpu.memory_space<vmem>>) attributes {dimension_semantics = [#tpu.dimension_semantics<parallel>], iteration_bounds = array<i64: 1>, scalar_prefetch = 0 : i64, scratch_operands = 0 : i64, tpu.core_type = #tpu.core_type<tc>, window_params = [{transform_indices = @transform_0, window_bounds = array<i64: 8, 64>}, {pipeline_mode = #tpu.pipeline_mode<synchronous>, transform_indices = @transform_1, window_bounds = array<i64: 8, 32>}, {transform_indices = @transform_2, window_bounds = array<i64: 8, 64>}]} {
    %c8_i32 = arith.constant 8 : i32
    %0 = arith.muli %arg0, %c8_i32 : i32
    %1 = tpu.assume_multiple %0, 8 : i32
    %2 = arith.index_cast %1 : i32 to index
    %c0 = arith.constant 0 : index
    %3 = vector.load %arg2[%2, %c0] : memref<8x32xf32, #tpu.memory_space<vmem>>, vector<8x32xf32>
    %c0_0 = arith.constant 0 : index
    %c0_1 = arith.constant 0 : index
    %4 = vector.load %arg1[%c0_0, %c0_1] : memref<8x64xf32, #tpu.memory_space<vmem>>, vector<8x64xf32>
    %5 = tpu.concatenate %3, %3 in 1 : vector<8x32xf32>, vector<8x32xf32> -> vector<8x64xf32>
    %6 = arith.addf %4, %5 : vector<8x64xf32>
    %c0_2 = arith.constant 0 : index
    %c0_3 = arith.constant 0 : index
    %7 = vector.load %arg3[%c0_2, %c0_3] : memref<8x64xf32, #tpu.memory_space<vmem>>, vector<8x64xf32>
    tpu.vector_store %arg3[%c0_2, %c0_3], %6 {strides = array<i32>} : memref<8x64xf32, #tpu.memory_space<vmem>>, vector<8x64xf32>,
    return
  }
  func.func @transform_0(%arg0: i32) -> (i32, i32) {
    %c0_i32 = arith.constant 0 : i32
    %c0_i32_0 = arith.constant 0 : i32
    return %arg0, %c0_i32 : i32, i32
  }
  func.func @transform_1(%arg0: i32) -> (i32, i32) {
    %c0_i32 = arith.constant 0 : i32
    %c0_i32_0 = arith.constant 0 : i32
    %c0_i32_1 = arith.constant 0 : i32
    return %c0_i32, %c0_i32_0 : i32, i32
  }
  func.func @transform_2(%arg0: i32) -> (i32, i32) {
    %c0_i32 = arith.constant 0 : i32
    %c0_i32_0 = arith.constant 0 : i32
    return %arg0, %c0_i32 : i32, i32
  }
}

</mosaic_0001>

<llo_original>
// kernel: tpu_custom_call.1
$region0: #{tpu_custom_call.1}
  #allocation0 [shape = 'u32[]', space=smem, size = 0x4, offset = 0x4, fixed_abs, tag = 'smem constant byte address 0x4 - core index']
  #allocation1 [shape = 'u32[144,128]{1,0:T(1,128)}', space=vmem, size = 0x12000, scoped, tag = 'internal scratch']
  %s0 = inlined_call_operand.hbm [shape: f32[8,64], index: 0, kind: input, shape index: {}]
  %s1 = inlined_call_operand.hbm [shape: f32[8,32], index: 1, kind: input, shape index: {}]
  %s2 = inlined_call_operand.hbm [shape: f32[8,64], index: 2, kind: output, shape index: {}]
  %s3 = sld [smem:[#allocation0]]
  $region26: #{tpu_custom_call.1} parent=0
    _
  %s5 = ssub.s32 1, %s3
  %s6 = scalar_select 0, %s5, %s3
  $region1: #{tpu_custom_call.1} parent=0
    #allocation2 [shape = 'u8[4096]{0}', space=vmem, size = 0x1000, scoped, tag = 'input window, operand 0, single buffered']
    #allocation3 [shape = 's32[1]{0}', space=sflag, size = 0x4, scoped, tag = 'scoped memory for tpu_custom_call.1']
    #allocation4 [shape = 's32[1]{0}', space=sflag, size = 0x4, scoped, tag = 'scoped memory for tpu_custom_call.1']
    #allocation5 [shape = 'u8[4096]{0}', space=vmem, size = 0x1000, scoped, tag = 'input window, operand 1, single buffered']
    #allocation6 [shape = 's32[1]{0}', space=sflag, size = 0x4, scoped, tag = 'scoped memory for tpu_custom_call.1']
    #allocation7 [shape = 'u8[4096]{0}', space=vmem, size = 0x1000, scoped, tag = 'output window, operand 0, single buffered']
    %7 = vsyncpa [#allocation3], 0
    %8 = vsyncpa [#allocation6], 0
    %9 = vsyncpa [#allocation4], 0
    // Predicated region
    $region2: #{tpu_custom_call.1} parent=1 // pred_check
      _
    $region3: #{tpu_custom_call.1} parent=1 // pred_check_branch
      %11 = sbr.rel (0) target = $region5
    $region4: #{tpu_custom_call.1} parent=1 // pred_region
      %s13 = ssub.s32 128, 128
      %14 = vsyncadd [#allocation3], %s13
      %s16 = sshll.u32 [#allocation2], 4
      %s17 = int_to_ptr.vmem [resolvable:$true] %s16
      %19 = dma.hbm_to_vmem [thread:$0]  %s0, 128, %s17, [#allocation3]
    $region5: #{tpu_custom_call.1} parent=1 // pred_fallthru
      _
    // Predicated region
    $region6: #{tpu_custom_call.1} parent=1 // pred_check
      _
    $region7: #{tpu_custom_call.1} parent=1 // pred_check_branch
      %21 = sbr.rel (0) target = $region9
    $region8: #{tpu_custom_call.1} parent=1 // pred_region
      %s23 = ssub.s32 128, 128
      %24 = vsyncadd [#allocation6], %s23
      %s26 = sshll.u32 [#allocation5], 4
      %s27 = int_to_ptr.vmem [resolvable:$true] %s26
      %29 = dma.hbm_to_vmem [thread:$0]  %s1, 128, %s27, [#allocation6]
    $region9: #{tpu_custom_call.1} parent=1 // pred_fallthru
      _
    // Predicated region
    $region10: #{tpu_custom_call.1} parent=1 // pred_check
      _
    $region11: #{tpu_custom_call.1} parent=1 // pred_check_branch
      %31 = sbr.rel (0) target = $region13
    $region12: #{tpu_custom_call.1} parent=1 // pred_region
      %32 = dma.done [#allocation3], 128
    $region13: #{tpu_custom_call.1} parent=1 // pred_fallthru
      _
    // Predicated region
    $region14: #{tpu_custom_call.1} parent=1 // pred_check
      _
    $region15: #{tpu_custom_call.1} parent=1 // pred_check_branch
      %34 = sbr.rel (0) target = $region17
    $region16: #{tpu_custom_call.1} parent=1 // pred_region
      %35 = dma.done [#allocation6], 128
    $region17: #{tpu_custom_call.1} parent=1 // pred_fallthru
      _
    %s36 = smul.u32 0, 8
    %s37 = scalar_lea.vmem [#allocation5], %s36
    %v38 = vld [vmem:[%s37] sm:$0xff]
    %v39 = vld [vmem:[#allocation2] sm:$0xff]
    %41 = vrot.lane.b32.xlu0 %v38, 32
    %v42 = vpop.permute.xlu0 %41
    %vm44 = vcmask 261120
    %v45 = vsel %vm44, %v38, %v42
    %v46 = vadd.f32 %v39, %v45
    %vm47 = vcmask 523264
    %48 = vst.msk [vmem:[#allocation7] sm:$0xff] %vm47, %v46
    // Predicated region
    $region18: #{tpu_custom_call.1} parent=1 // pred_check
      _
    $region19: #{tpu_custom_call.1} parent=1 // pred_check_branch
      %50 = sbr.rel (0) target = $region21
    $region20: #{tpu_custom_call.1} parent=1 // pred_region
      %s52 = ssub.s32 128, 128
      %53 = vsyncadd [#allocation4], %s52
      %s55 = sshll.u32 [#allocation7], 4
      %s56 = int_to_ptr.vmem [resolvable:$true] %s55
      %58 = dma.vmem_to_hbm [thread:$0]  %s56, 128, %s2, [#allocation4]
    $region21: #{tpu_custom_call.1} parent=1 // pred_fallthru
      _
    // Predicated region
    $region22: #{tpu_custom_call.1} parent=1 // pred_check
      _
    $region23: #{tpu_custom_call.1} parent=1 // pred_check_branch
      %60 = sbr.rel (0) target = $region25
    $region24: #{tpu_custom_call.1} parent=1 // pred_region
      %61 = dma.done [#allocation4], 128
    $region25: #{tpu_custom_call.1} parent=1 // pred_fallthru
      _
    %62 = vsyncpa [#allocation3], 1
    %63 = vsyncpa [#allocation6], 1
    %64 = vsyncpa [#allocation4], 1

</llo_original>
